<compile_context>
chip_gen: v5e
topology: v5e:2x2
jax: 0.10.0
libtpu: 0.0.40
codegen_flags: <defaults>
</compile_context>

<pallas_src>
import functools

import jax
import jax.numpy as jnp
from jax.experimental import pallas as pl
from jax.experimental.pallas import tpu as pltpu


# ----------------------------------------------------------------------------
# Kernel: one fused matmul + bias + tanh + residual per (sorted) batch element.
# ----------------------------------------------------------------------------
def _rd_kernel(bmap_ref, smap_ref, x_ref, w_ref, b_ref, o_ref, *, num_nodes):
    """bmap_ref/smap_ref: scalar-prefetch maps (used only by the index_maps).
       x_ref: (L, N)  input tile, nodes on the lane axis
       w_ref: (N, 2N) per-slot fused pre-transposed operator [A_r^T | A_d^T]
       b_ref: (1, 2N) per-slot fused bias row [bias_r | bias_d]
       o_ref: (L, N)  tanh(reaction)^T + diffusion^T + x^T
    """
    del bmap_ref, smap_ref  # consumed by the BlockSpec index maps
    x = x_ref[...]                                                   # (L, N)
    y = jnp.dot(x, w_ref[...],
                preferred_element_type=jnp.float32) + b_ref[...]     # (L, 2N)
    o_ref[...] = jnp.tanh(y[:, :num_nodes]) + y[:, num_nodes:] + x


# ----------------------------------------------------------------------------
# Wrapper-side operator construction (hoisted out of the kernel, slot-deduped).
# ----------------------------------------------------------------------------
def _build_operators(uslots, edge_i, edge_j, weight_react, weight_diff,
                     bias_reaction, bias_diffusion, num_nodes, symetric):
    """Fused, pre-transposed operators for each UNIQUE time slot.

    Returns w_cat (U, N, 2N) = [A_r^T | A_d^T] and b_cat (U, 1, 2N).
    """
    n = num_nodes
    num_u = int(uslots.shape[0])

    wr = weight_react[uslots].astype(jnp.float32)      # (U, E)
    wd = weight_diff[uslots].astype(jnp.float32)       # (U, E)
    br = bias_reaction[uslots].astype(jnp.float32)     # (U, N)
    bd = bias_diffusion[uslots].astype(jnp.float32)    # (U, N)

    rows = edge_i.astype(jnp.int32)
    cols = edge_j.astype(jnp.int32)
    if symetric:
        rows, cols = (jnp.concatenate([rows, cols]),
                      jnp.concatenate([cols, rows]))
        wr = jnp.concatenate([wr, wr], axis=1)
        wd = jnp.concatenate([wd, wd], axis=1)

    # Scatter straight into the TRANSPOSED dense operators (index [col, row])
    # for every unique slot and both operators with a single segment_sum
    # (replaces the per-batch .at[rows, cols].add scatter loop).
    flat_t = cols * n + rows                                            # (Et,)
    data = jnp.concatenate([wr, wd], axis=0)                            # (2U, Et)
    dense_t = jax.ops.segment_sum(data.T, flat_t, num_segments=n * n)   # (n*n, 2U)
    dense_t = dense_t.T.reshape(2 * num_u, n, n)                        # [k, c, r]
    r_t, d_t = dense_t[:num_u], dense_t[num_u:]                         # R^T, D^T

    # torch: diag(sum(W, dim=1)) == diag of COLUMN sums of W == row sums of W^T.
    col_r = jnp.sum(r_t, axis=2)                                        # (U, N)
    col_d = jnp.sum(d_t, axis=2)
    eye = jnp.eye(n, dtype=jnp.float32)
    a_r_t = r_t + col_r[:, :, None] * eye          # (diag(colsum R) + R)^T
    a_d_t = col_d[:, :, None] * eye - d_t          # (diag(colsum D) - D)^T

    w_cat = jnp.concatenate([a_r_t, a_d_t], axis=2)                     # (U, N, 2N)
    b_cat = jnp.concatenate([br, bd], axis=1)[:, None, :]               # (U, 1, 2N)
    return w_cat, b_cat


# ----------------------------------------------------------------------------
# Jitted traced path: operator build + pallas_call + fused transpose/reshape.
# ----------------------------------------------------------------------------
@functools.partial(jax.jit, static_argnames=("symetric",))
def _forward_impl(inputs, uslots, batch_map, slot_map, edge_i, edge_j,
                  weight_react, weight_diff, bias_reaction, bias_diffusion,
                  symetric):
    B, s1, s2, N = inputs.shape
    L = s1 * s2

    # inputs.reshape(B, L, N): node axis stays on the lanes; the torch
    # transpose(1,2) is absorbed by the transposed matmul form in the kernel.
    x_t = inputs.reshape(B, L, N).astype(jnp.float32)

    w_cat, b_cat = _build_operators(
        uslots, edge_i, edge_j, weight_react, weight_diff,
        bias_reaction, bias_diffusion, N, symetric)

    grid_spec = pltpu.PrefetchScalarGridSpec(
        num_scalar_prefetch=2,               # batch_map, slot_map
        grid=(B,),
        in_specs=[
            # x: fetch the (sorted) batch element for this grid step
            pl.BlockSpec((None, L, N), lambda b, bm, sm: (bm[b], 0, 0)),
            # W_cat / bias: shared per time slot; consecutive same-slot steps
            # reuse the resident block (no re-DMA).
            pl.BlockSpec((None, N, 2 * N), lambda b, bm, sm: (sm[b], 0, 0)),
            pl.BlockSpec((None, 1, 2 * N), lambda b, bm, sm: (sm[b], 0, 0)),
        ],
        out_specs=pl.BlockSpec((None, L, N), lambda b, bm, sm: (bm[b], 0, 0)),
    )

    out_t = pl.pallas_call(
        functools.partial(_rd_kernel, num_nodes=N),
        grid_spec=grid_spec,
        out_shape=jax.ShapeDtypeStruct((B, L, N), jnp.float32),
        compiler_params=pltpu.CompilerParams(
            dimension_semantics=("parallel",)),
    )(batch_map, slot_map, x_t, w_cat, b_cat)

    # Back to torch layout (B, N, L), then the module's raw reshape; both are
    # fused into this jit (no standalone transpose dispatch).
    return jnp.swapaxes(out_t, 1, 2).reshape(inputs.shape)


# ----------------------------------------------------------------------------
# Forward wrapper (host-side static prep of `ind`, exactly like the torch code).
# ----------------------------------------------------------------------------
def reaction_diffusion_gcn_forward(inputs, ind, edge_i, edge_j,
                                   weight_react, weight_diff,
                                   bias_reaction, bias_diffusion,
                                   resolution=12, symetric=True):
    """inputs: (B, s1, s2, N); ind: host python list (as in the torch module)."""
    slots = [int(i) // resolution for i in ind]
    uslots = sorted(set(slots))                          # unique time slots used
    slot_pos = {s: k for k, s in enumerate(uslots)}
    # Sort batch elements by slot so consecutive grid steps share the W block.
    order = sorted(range(len(slots)), key=lambda b: (slot_pos[slots[b]], b))
    batch_map = jnp.asarray(order, dtype=jnp.int32)                       # step -> batch
    slot_map = jnp.asarray([slot_pos[slots[b]] for b in order], jnp.int32)  # step -> W block
    uslots_arr = jnp.asarray(uslots, dtype=jnp.int32)

    return _forward_impl(inputs, uslots_arr, batch_map, slot_map,
                         edge_i, edge_j, weight_react, weight_diff,
                         bias_reaction, bias_diffusion, symetric=symetric)


# ----------------------------------------------------------------------------
# Pure-JAX reference mirroring the PyTorch module literally.
# ----------------------------------------------------------------------------
def _reference(inputs, ind, edge_i, edge_j, weight_react, weight_diff,
               bias_reaction, bias_diffusion, resolution, symetric):
    B, s1, s2, N = inputs.shape
    L = s1 * s2
    x = inputs.reshape(B, L, N).transpose(0, 2, 1)            # (B, N, L)

    if symetric:
        rows = jnp.concatenate([edge_i, edge_j])
        cols = jnp.concatenate([edge_j, edge_i])
    else:
        rows, cols = edge_i, edge_j

    a_r, a_d, b_r, b_d = [], [], [], []
    for raw in ind:
        k = int(raw) // resolution
        wr, wd = weight_react[k], weight_diff[k]
        if symetric:
            wr = jnp.concatenate([wr, wr])
            wd = jnp.concatenate([wd, wd])
        R = jnp.zeros((N, N), jnp.float32).at[rows, cols].add(wr)
        D = jnp.zeros((N, N), jnp.float32).at[rows, cols].add(wd)
        a_r.append(jnp.diag(jnp.sum(R, axis=0)) + R)
        a_d.append(jnp.diag(jnp.sum(D, axis=0)) - D)
        b_r.append(bias_reaction[k][:, None])
        b_d.append(bias_diffusion[k][:, None])

    a_r, a_d = jnp.stack(a_r), jnp.stack(a_d)
    b_r, b_d = jnp.stack(b_r), jnp.stack(b_d)

    reaction = jnp.einsum('nvl,nwv->nwl', x, a_r) + b_r
    diffusion = jnp.einsum('nvl,nwv->nwl', x, a_d) + b_d
    result = jnp.tanh(reaction) + diffusion + x               # (B, N, L)
    return result.reshape(inputs.shape)


# ----------------------------------------------------------------------------
if __name__ == "__main__":
    NODE = 128        # real metr-la model has 207 nodes; 128 keeps it small & lane-aligned
    RES = 12          # resolution -> 288 // 12 = 24 time slots
    SLOTS = 288 // RES
    B, S1, S2 = 3, 2, 8            # inputs (B, s1, s2, NODE); L = s1*s2 = 16
    SYMETRIC = True

    key = jax.random.PRNGKey(0)
    k_edge, k_wr, k_wd, k_br, k_bd, k_x = jax.random.split(key, 6)

    # deterministic synthetic edge list (stands in for the adjacency CSV):
    # a ring plus NODE random extra edges.
    ring_i = jnp.arange(NODE, dtype=jnp.int32)
    ring_j = (ring_i + 1) % NODE
    rnd_i = jax.random.randint(k_edge, (NODE,), 0, NODE, dtype=jnp.int32)
    rnd_j = jax.random.randint(jax.random.fold_in(k_edge, 1), (NODE,), 0, NODE,
                               dtype=jnp.int32)
    edge_i = jnp.concatenate([ring_i, rnd_i])
    edge_j = jnp.concatenate([ring_j, rnd_j])
    EDGES = int(edge_i.shape[0])

    # parameters, matching the torch init scales
    weight_react = jax.random.normal(k_wr, (SLOTS, EDGES), jnp.float32) / 10.0
    weight_diff = jax.random.normal(k_wd, (SLOTS, EDGES), jnp.float32) / 1000.0
    bias_reaction = jax.random.normal(k_br, (SLOTS, NODE), jnp.float32) / 10.0
    bias_diffusion = jax.random.normal(k_bd, (SLOTS, NODE), jnp.float32) / 10.0

    inputs = jax.random.normal(k_x, (B, S1, S2, NODE), jnp.float32)
    # slots = [2, 0, 2]: exercises both the batch sort (permutation) and the
    # slot dedup (two batches share one W block, DMA skipped on the 2nd use).
    ind = [30, 0, 25]

    out = reaction_diffusion_gcn_forward(
        inputs, ind, edge_i, edge_j, weight_react, weight_diff,
        bias_reaction, bias_diffusion, resolution=RES, symetric=SYMETRIC)
    out = jax.block_until_ready(out)

    ref = _reference(inputs, ind, edge_i, edge_j, weight_react, weight_diff,
                     bias_reaction, bias_diffusion, RES, SYMETRIC)

    assert out.shape == inputs.shape
    max_err = float(jnp.max(jnp.abs(out - ref)))
    assert jnp.allclose(out, ref, atol=1e-4, rtol=1e-4), f"mismatch: {max_err}"

    print("KERNEL_OK")
</pallas_src>

<mosaic_0001>
module attributes {stable_mosaic.version = 11 : i64} {
  func.func @_rd_kernel(%arg0: i32, %arg1: memref<3xi32, #tpu.memory_space<smem>>, %arg2: memref<3xi32, #tpu.memory_space<smem>>, %arg3: memref<1x16x128xf32, #tpu.memory_space<vmem>>, %arg4: memref<1x128x256xf32, #tpu.memory_space<vmem>>, %arg5: memref<1x1x256xf32, #tpu.memory_space<vmem>>, %arg6: memref<1x16x128xf32, #tpu.memory_space<vmem>>) attributes {dimension_semantics = [#tpu.dimension_semantics<parallel>], iteration_bounds = array<i64: 3>, scalar_prefetch = 2 : i64, scratch_operands = 0 : i64, tpu.core_type = #tpu.core_type<tc>, window_params = [{transform_indices = @transform_0, window_bounds = array<i64: 1, 16, 128>}, {transform_indices = @transform_1, window_bounds = array<i64: 1, 128, 256>}, {transform_indices = @transform_2, window_bounds = array<i64: 1, 1, 256>}, {transform_indices = @transform_3, window_bounds = array<i64: 1, 16, 128>}]} {
    %c0 = arith.constant 0 : index
    %c0_0 = arith.constant 0 : index
    %c0_1 = arith.constant 0 : index
    %0 = vector.load %arg3[%c0, %c0_0, %c0_1] : memref<1x16x128xf32, #tpu.memory_space<vmem>>, vector<1x16x128xf32>
    %1 = vector.shape_cast %0 : vector<1x16x128xf32> to vector<16x128xf32>
    %c0_2 = arith.constant 0 : index
    %c0_3 = arith.constant 0 : index
    %c0_4 = arith.constant 0 : index
    %2 = vector.load %arg4[%c0_2, %c0_3, %c0_4] : memref<1x128x256xf32, #tpu.memory_space<vmem>>, vector<1x128x256xf32>
    %3 = vector.shape_cast %2 : vector<1x128x256xf32> to vector<128x256xf32>
    %cst = arith.constant dense<0.000000e+00> : vector<16x256xf32>
    %4 = tpu.matmul %1, %3, %cst {dimension_numbers = #tpu.dot_dimension_numbers<[1], [0], [0], [1], [0, 0, 1, 1], [], []>} : vector<16x128xf32>, vector<128x256xf32>, vector<16x256xf32> -> vector<16x256xf32>
    %c0_5 = arith.constant 0 : index
    %c0_6 = arith.constant 0 : index
    %c0_7 = arith.constant 0 : index
    %5 = vector.load %arg5[%c0_5, %c0_6, %c0_7] : memref<1x1x256xf32, #tpu.memory_space<vmem>>, vector<1x1x256xf32>
    %6 = vector.shape_cast %5 : vector<1x1x256xf32> to vector<1x256xf32>
    %7 = vector.broadcast %6 : vector<1x256xf32> to vector<16x256xf32>
    %8 = arith.addf %4, %7 : vector<16x256xf32>
    %9 = vector.extract_strided_slice %8 {offsets = [0, 0], sizes = [16, 128], strides = [1, 1]} : vector<16x256xf32> to vector<16x128xf32>
    %10 = math.tanh %9 : vector<16x128xf32>
    %11 = vector.extract_strided_slice %8 {offsets = [0, 128], sizes = [16, 128], strides = [1, 1]} : vector<16x256xf32> to vector<16x128xf32>
    %12 = arith.addf %10, %11 : vector<16x128xf32>
    %13 = arith.addf %12, %1 : vector<16x128xf32>
    %c0_8 = arith.constant 0 : index
    %c0_9 = arith.constant 0 : index
    %c0_10 = arith.constant 0 : index
    %14 = vector.load %arg6[%c0_8, %c0_9, %c0_10] : memref<1x16x128xf32, #tpu.memory_space<vmem>>, vector<1x16x128xf32>
    %15 = vector.shape_cast %14 : vector<1x16x128xf32> to vector<16x128xf32>
    %16 = vector.shape_cast %13 : vector<16x128xf32> to vector<1x16x128xf32>
    tpu.vector_store %arg6[%c0_8, %c0_9, %c0_10], %16 {strides = array<i32>} : memref<1x16x128xf32, #tpu.memory_space<vmem>>, vector<1x16x128xf32>,
    return
  }
  func.func @transform_0(%arg0: i32, %arg1: memref<3xi32, #tpu.memory_space<smem>>, %arg2: memref<3xi32, #tpu.memory_space<smem>>) -> (i32, i32, i32) {
    %0 = arith.index_cast %arg0 : i32 to index
    %1 = memref.load %arg1[%0] : memref<3xi32, #tpu.memory_space<smem>>
    %c0_i32 = arith.constant 0 : i32
    %c0_i32_0 = arith.constant 0 : i32
    %c0_i32_1 = arith.constant 0 : i32
    return %1, %c0_i32, %c0_i32_0 : i32, i32, i32
  }
  func.func @transform_1(%arg0: i32, %arg1: memref<3xi32, #tpu.memory_space<smem>>, %arg2: memref<3xi32, #tpu.memory_space<smem>>) -> (i32, i32, i32) {
    %0 = arith.index_cast %arg0 : i32 to index
    %1 = memref.load %arg2[%0] : memref<3xi32, #tpu.memory_space<smem>>
    %c0_i32 = arith.constant 0 : i32
    %c0_i32_0 = arith.constant 0 : i32
    %c0_i32_1 = arith.constant 0 : i32
    return %1, %c0_i32, %c0_i32_0 : i32, i32, i32
  }
  func.func @transform_2(%arg0: i32, %arg1: memref<3xi32, #tpu.memory_space<smem>>, %arg2: memref<3xi32, #tpu.memory_space<smem>>) -> (i32, i32, i32) {
    %0 = arith.index_cast %arg0 : i32 to index
    %1 = memref.load %arg2[%0] : memref<3xi32, #tpu.memory_space<smem>>
    %c0_i32 = arith.constant 0 : i32
    %c0_i32_0 = arith.constant 0 : i32
    %c0_i32_1 = arith.constant 0 : i32
    return %1, %c0_i32, %c0_i32_0 : i32, i32, i32
  }
  func.func @transform_3(%arg0: i32, %arg1: memref<3xi32, #tpu.memory_space<smem>>, %arg2: memref<3xi32, #tpu.memory_space<smem>>) -> (i32, i32, i32) {
    %0 = arith.index_cast %arg0 : i32 to index
    %1 = memref.load %arg1[%0] : memref<3xi32, #tpu.memory_space<smem>>
    %c0_i32 = arith.constant 0 : i32
    %c0_i32_0 = arith.constant 0 : i32
    %c0_i32_1 = arith.constant 0 : i32
    return %1, %c0_i32, %c0_i32_0 : i32, i32, i32
  }
}

</mosaic_0001>

<llo_original>
// kernel: _forward_impl.1
$region0: #{_forward_impl.1}
  #allocation0 [shape = 'u32[]', space=smem, size = 0x4, offset = 0x4, fixed_abs, tag = 'smem constant byte address 0x4 - core index']
  #allocation1 [shape = 'u32[72,128]{1,0:T(1,128)}', space=vmem, size = 0x9000, scoped, tag = 'internal scratch']
  #allocation2 [shape = 's32[1]{0}', space=sflag, size = 0x4, scoped, tag = 'scoped memory for _forward_impl.1']
  #allocation3 [shape = 'u8[512]{0}', space=smem, size = 0x200, scoped, tag = 'prefetched SMEM operand 0']
  #allocation4 [shape = 'u8[512]{0}', space=smem, size = 0x200, scoped, tag = 'prefetched SMEM operand 1']
  %s0 = inlined_call_operand.vmem [shape: s32[3], index: 0, kind: input, shape index: {}]
  %s1 = inlined_call_operand.vmem [shape: s32[3], index: 1, kind: input, shape index: {}]
  %s2 = inlined_call_operand.vmem [shape: f32[3,16,128], index: 2, kind: input, shape index: {}]
  %s3 = inlined_call_operand.vmem [shape: f32[2,128,256], index: 3, kind: input, shape index: {}]
  %s4 = inlined_call_operand.vmem [shape: f32[2,1,256], index: 4, kind: input, shape index: {}]
  %s5 = inlined_call_operand.vmem [shape: f32[3,16,128], index: 5, kind: output, shape index: {}]
  %s6 = sld [smem:[#allocation0]]
  $region45: #{_forward_impl.1} parent=0
    _
  %s8 = ssub.s32 1, %s6
  %s9 = scalar_select 0, %s8, %s6
  %s11 = sshll.u32 %s0, 4
  %s12 = int_to_ptr.vmem [resolvable:$true] %s11
  %14 = dma.vmem_to_smem %s12, 16, [#allocation3], [#allocation2]
  %s16 = sshll.u32 %s1, 4
  %s17 = int_to_ptr.vmem [resolvable:$true] %s16
  %19 = dma.vmem_to_smem %s17, 16, [#allocation4], [#allocation2]
  %21 = dma.done [#allocation2], 32
  %22 = sfence
  loop: start=0, step=1, limit=5
  $region2: #{_forward_impl.1} parent=0 // loop_pre_header
    _
  $region3: #{_forward_impl.1} parent=0 // loop_header
    %s24 = sphi 0, %s28
    %p25 = scmp.ge.s32.totalorder %s24, 5
    %s36 = sphi 0, %s38
    %s39 = sphi 0, %s36
    %s40 = sphi 0, %s39
    %s56 = sphi 0, %s40
    %s64 = sphi 0, %s66
    %s67 = sphi 0, %s64
    %s68 = sphi 0, %s67
    %s84 = sphi 0, %s68
    %s92 = sphi 0, %s94
    %s95 = sphi 0, %s92
    %s96 = sphi 0, %s95
    %s112 = sphi 0, %s96
    %s120 = sphi 0, %s122
    %s123 = sphi 0, %s120
    %s124 = sphi 0, %s123
    %s140 = sphi 0, %s124
  $region4: #{_forward_impl.1} parent=0 // loop_header_branch
    %27 = sbr.rel (%p25) target = $region8
  $region5: #{_forward_impl.1} parent=0 // loop_body
    %s29 = ssub.s32 %s24, 1
    %s30 = ssub.s32 %s24, 2
    %s31 = sadd.s32 %s24, 1
    %s32 = sld [smem:[#allocation3 + %s24]]
    %s33 = sld [smem:[#allocation3 + %s31]]
    %s34 = ssub.s32 %s32, %s33
    %p35 = scmp.eq.s32.totalorder %s34, 0
    %s37 = sadd.s32 %s36, 1
    %s38 = scalar_select %p35, %s36, %s37
    %p41 = pneg %p35
    %p42 = scmp.eq.s32.totalorder %s24, 2
    %p43 = por %p41, %p42
    %p44 = scmp.ne.s32.totalorder %s36, %s39
    %p45 = scmp.eq.s32.totalorder %s24, 0
    %p46 = por %p44, %p45
    %p47 = scmp.ne.s32.totalorder %s36, %s39
    %p48 = scmp.eq.s32.totalorder %s29, 2
    %p49 = por %p47, %p48
    %p50 = scmp.ne.s32.totalorder %s39, %s40
    %p51 = scmp.eq.s32.totalorder %s29, 0
    %p52 = por %p50, %p51
    %p53 = scmp.ne.s32.totalorder %s39, %s40
    %p54 = scmp.eq.s32.totalorder %s30, 2
    %p55 = por %p53, %p54
    %p57 = scmp.ne.s32.totalorder %s40, %s56
    %p58 = scmp.eq.s32.totalorder %s30, 0
    %p59 = por %p57, %p58
    %s60 = sld [smem:[#allocation4 + %s24]]
    %s61 = sld [smem:[#allocation4 + %s31]]
    %s62 = ssub.s32 %s60, %s61
    %p63 = scmp.eq.s32.totalorder %s62, 0
    %s65 = sadd.s32 %s64, 1
    %s66 = scalar_select %p63, %s64, %s65
    %p69 = pneg %p63
    %p70 = scmp.eq.s32.totalorder %s24, 2
    %p71 = por %p69, %p70
    %p72 = scmp.ne.s32.totalorder %s64, %s67
    %p73 = scmp.eq.s32.totalorder %s24, 0
    %p74 = por %p72, %p73
    %p75 = scmp.ne.s32.totalorder %s64, %s67
    %p76 = scmp.eq.s32.totalorder %s29, 2
    %p77 = por %p75, %p76
    %p78 = scmp.ne.s32.totalorder %s67, %s68
    %p79 = scmp.eq.s32.totalorder %s29, 0
    %p80 = por %p78, %p79
    %p81 = scmp.ne.s32.totalorder %s67, %s68
    %p82 = scmp.eq.s32.totalorder %s30, 2
    %p83 = por %p81, %p82
    %p85 = scmp.ne.s32.totalorder %s68, %s84
    %p86 = scmp.eq.s32.totalorder %s30, 0
    %p87 = por %p85, %p86
    %s88 = sld [smem:[#allocation4 + %s24]]
    %s89 = sld [smem:[#allocation4 + %s31]]
    %s90 = ssub.s32 %s88, %s89
    %p91 = scmp.eq.s32.totalorder %s90, 0
    %s93 = sadd.s32 %s92, 1
    %s94 = scalar_select %p91, %s92, %s93
    %p97 = pneg %p91
    %p98 = scmp.eq.s32.totalorder %s24, 2
    %p99 = por %p97, %p98
    %p100 = scmp.ne.s32.totalorder %s92, %s95
    %p101 = scmp.eq.s32.totalorder %s24, 0
    %p102 = por %p100, %p101
    %p103 = scmp.ne.s32.totalorder %s92, %s95
    %p104 = scmp.eq.s32.totalorder %s29, 2
    %p105 = por %p103, %p104
    %p106 = scmp.ne.s32.totalorder %s95, %s96
    %p107 = scmp.eq.s32.totalorder %s29, 0
    %p108 = por %p106, %p107
    %p109 = scmp.ne.s32.totalorder %s95, %s96
    %p110 = scmp.eq.s32.totalorder %s30, 2
    %p111 = por %p109, %p110
    %p113 = scmp.ne.s32.totalorder %s96, %s112
    %p114 = scmp.eq.s32.totalorder %s30, 0
    %p115 = por %p113, %p114
    %s116 = sld [smem:[#allocation3 + %s24]]
    %s117 = sld [smem:[#allocation3 + %s31]]
    %s118 = ssub.s32 %s116, %s117
    %p119 = scmp.eq.s32.totalorder %s118, 0
    %s121 = sadd.s32 %s120, 1
    %s122 = scalar_select %p119, %s120, %s121
    %p125 = pneg %p119
    %p126 = scmp.eq.s32.totalorder %s24, 2
    %p127 = por %p125, %p126
    %p128 = scmp.ne.s32.totalorder %s120, %s123
    %p129 = scmp.eq.s32.totalorder %s24, 0
    %p130 = por %p128, %p129
    %p131 = scmp.ne.s32.totalorder %s120, %s123
    %p132 = scmp.eq.s32.totalorder %s29, 2
    %p133 = por %p131, %p132
    %p134 = scmp.ne.s32.totalorder %s123, %s124
    %p135 = scmp.eq.s32.totalorder %s29, 0
    %p136 = por %p134, %p135
    %p137 = scmp.ne.s32.totalorder %s123, %s124
    %p138 = scmp.eq.s32.totalorder %s30, 2
    %p139 = por %p137, %p138
    %p141 = scmp.ne.s32.totalorder %s124, %s140
    %p142 = scmp.eq.s32.totalorder %s30, 0
    %p143 = por %p141, %p142
    %p144 = scmp.le.s32.totalorder 1, %s24
    %p145 = scmp.lt.s32.totalorder %s24, 4
    %p146 = pnand %p144, %p145
    %p147 = pneg %p146
    // Predicated region
    $region9: #{_forward_impl.1} parent=5 // pred_check
      _
    $region10: #{_forward_impl.1} parent=5 // pred_check_branch
      %149 = sbr.rel (%p146) target = $region12
    $region11: #{_forward_impl.1} parent=5 // pred_region
      %s150 = ssub.s32 %s24, 1
    $region12: #{_forward_impl.1} parent=5 // pred_fallthru
      _
    %p151 = scmp.lt.s32.totalorder %s24, 3
    // Predicated region
    $region13: #{_forward_impl.1} parent=5 // pred_check
      %p152 = pneg %p151
    $region14: #{_forward_impl.1} parent=5 // pred_check_branch
      %154 = sbr.rel (%p152) target = $region16
    $region15: #{_forward_impl.1} parent=5 // pred_region
      // Predicated region
      $region17: #{_forward_impl.1} parent=15 // pred_check
        %p155 = pneg %p46
      $region18: #{_forward_impl.1} parent=15 // pred_check_branch
        %157 = sbr.rel (%p155) target = $region20
      $region19: #{_forward_impl.1} parent=15 // pred_region
        %s158 = sld [smem:[#allocation3 + %s24]]
        %p159 = scmp.lt.s32.totalorder %s158, 2
        %s160 = scalar_select %p159, %s158, 2
        %s161 = smul.addr %s160, 2
        %s162 = smul.addr %s161, 8
        %s163 = scalar_lea.vmem %s2, %s162
        %s164 = sld [smem:[#allocation3 + %s24]]
      $region20: #{_forward_impl.1} parent=15 // pred_fallthru
        _
      // Predicated region
      $region21: #{_forward_impl.1} parent=15 // pred_check
        %p165 = pneg %p74
      $region22: #{_forward_impl.1} parent=15 // pred_check_branch
        %167 = sbr.rel (%p165) target = $region24
      $region23: #{_forward_impl.1} parent=15 // pred_region
        %s168 = sld [smem:[#allocation4 + %s24]]
        %p169 = scmp.lt.s32.totalorder %s168, 1
        %s170 = scalar_select %p169, %s168, 1
        %s171 = smul.addr %s170, 32
        %s172 = smul.addr %s171, 8
        %s173 = scalar_lea.vmem %s3, %s172
        %s174 = sld [smem:[#allocation4 + %s24]]
      $region24: #{_forward_impl.1} parent=15 // pred_fallthru
        _
      // Predicated region
      $region25: #{_forward_impl.1} parent=15 // pred_check
        %p175 = pneg %p102
      $region26: #{_forward_impl.1} parent=15 // pred_check_branch
        %177 = sbr.rel (%p175) target = $region28
      $region27: #{_forward_impl.1} parent=15 // pred_region
        %s178 = sld [smem:[#allocation4 + %s24]]
        %p179 = scmp.lt.s32.totalorder %s178, 1
        %s180 = scalar_select %p179, %s178, 1
        %s181 = smul.addr %s180, 2
        %s182 = scalar_lea.vmem %s4, %s181
        %s183 = sld [smem:[#allocation4 + %s24]]
      $region28: #{_forward_impl.1} parent=15 // pred_fallthru
        _
    $region16: #{_forward_impl.1} parent=5 // pred_fallthru
      _
    %p184 = scmp.le.s32.totalorder 1, %s24
    %p185 = scmp.lt.s32.totalorder %s24, 4
    %p186 = pnand %p184, %p185
    %p187 = pneg %p186
    // Predicated region
    $region29: #{_forward_impl.1} parent=5 // pred_check
      _
    $region30: #{_forward_impl.1} parent=5 // pred_check_branch
      %189 = sbr.rel (%p186) target = $region32
    $region31: #{_forward_impl.1} parent=5 // pred_region
      %s190 = ssub.s32 %s24, 1
      %s191 = sld [smem:[#allocation3 + %s29]]
      %p192 = scmp.lt.s32.totalorder %s191, 2
      %s193 = scalar_select %p192, %s191, 2
      %s194 = smul.addr %s193, 2
      %s195 = smul.addr %s194, 8
      %s196 = scalar_lea.vmem %s2, %s195
      %p197 = pneg %p52
      %p198 = pneg %p49
      %s199 = sld [smem:[#allocation4 + %s29]]
      %p200 = scmp.lt.s32.totalorder %s199, 1
      %s201 = scalar_select %p200, %s199, 1
      %s202 = smul.addr %s201, 32
      %s203 = smul.addr %s202, 8
      %s204 = scalar_lea.vmem %s3, %s203
      %p205 = pneg %p80
      %p206 = pneg %p77
      %s207 = sld [smem:[#allocation4 + %s29]]
      %p208 = scmp.lt.s32.totalorder %s207, 1
      %s209 = scalar_select %p208, %s207, 1
      %s210 = smul.addr %s209, 2
      %s211 = scalar_lea.vmem %s4, %s210
      %p212 = pneg %p108
      %p213 = pneg %p105
      %p214 = pneg %p136
      %p215 = pneg %p133
      %s216 = sld [smem:[#allocation3 + %s29]]
      %p217 = scmp.lt.s32.totalorder %s216, 2
      %s218 = scalar_select %p217, %s216, 2
      %s219 = smul.addr %s218, 2
      %s220 = smul.addr %s219, 8
      %s221 = scalar_lea.vmem %s5, %s220
      %s222 = sld [smem:[#allocation3 + %s29]]
      %p223 = scmp.lt.s32.totalorder %s222, 2
      %s224 = scalar_select %p223, %s222, 2
      %s225 = smul.addr %s224, 2
      %s226 = smul.addr %s225, 8
      %s227 = scalar_lea.vmem %s2, %s226
      %s228 = sld [smem:[#allocation3 + %s29]]
      %s229 = sld [smem:[#allocation4 + %s29]]
      %p230 = scmp.lt.s32.totalorder %s229, 1
      %s231 = scalar_select %p230, %s229, 1
      %s232 = smul.addr %s231, 32
      %s233 = smul.addr %s232, 8
      %s234 = scalar_lea.vmem %s3, %s233
      %s235 = sld [smem:[#allocation4 + %s29]]
      %s236 = sld [smem:[#allocation4 + %s29]]
      %p237 = scmp.lt.s32.totalorder %s236, 1
      %s238 = scalar_select %p237, %s236, 1
      %s239 = smul.addr %s238, 2
      %s240 = scalar_lea.vmem %s4, %s239
      %s241 = sld [smem:[#allocation4 + %s29]]
      %s242 = sld [smem:[#allocation3 + %s29]]
      %p243 = scmp.lt.s32.totalorder %s242, 2
      %s244 = scalar_select %p243, %s242, 2
      %s245 = smul.addr %s244, 2
      %s246 = smul.addr %s245, 8
      %s247 = scalar_lea.vmem %s5, %s246
      %s248 = sld [smem:[#allocation3 + %s29]]
      %v249 = vld [vmem:[%s227] sm:$0xff]
      %v250 = vld [vmem:[%s227 + $0x8] sm:$0xff]
      %v251 = vld [vmem:[%s234] sm:$0xff]
      %v252 = vld [vmem:[%s234 + $0x8] sm:$0xff]
      %v253 = vld [vmem:[%s234 + $0x10] sm:$0xff]
      %v254 = vld [vmem:[%s234 + $0x18] sm:$0xff]
      %v255 = vld [vmem:[%s234 + $0x20] sm:$0xff]
      %v256 = vld [vmem:[%s234 + $0x28] sm:$0xff]
      %v257 = vld [vmem:[%s234 + $0x30] sm:$0xff]
      %v258 = vld [vmem:[%s234 + $0x38] sm:$0xff]
      %v259 = vld [vmem:[%s234 + $0x40] sm:$0xff]
      %v260 = vld [vmem:[%s234 + $0x48] sm:$0xff]
      %v261 = vld [vmem:[%s234 + $0x50] sm:$0xff]
      %v262 = vld [vmem:[%s234 + $0x58] sm:$0xff]
      %v263 = vld [vmem:[%s234 + $0x60] sm:$0xff]
      %v264 = vld [vmem:[%s234 + $0x68] sm:$0xff]
      %v265 = vld [vmem:[%s234 + $0x70] sm:$0xff]
      %v266 = vld [vmem:[%s234 + $0x78] sm:$0xff]
      %v267 = vld [vmem:[%s234 + $0x80] sm:$0xff]
      %v268 = vld [vmem:[%s234 + $0x88] sm:$0xff]
      %v269 = vld [vmem:[%s234 + $0x90] sm:$0xff]
      %v270 = vld [vmem:[%s234 + $0x98] sm:$0xff]
      %v271 = vld [vmem:[%s234 + $0xa0] sm:$0xff]
      %v272 = vld [vmem:[%s234 + $0xa8] sm:$0xff]
      %v273 = vld [vmem:[%s234 + $0xb0] sm:$0xff]
      %v274 = vld [vmem:[%s234 + $0xb8] sm:$0xff]
      %v275 = vld [vmem:[%s234 + $0xc0] sm:$0xff]
      %v276 = vld [vmem:[%s234 + $0xc8] sm:$0xff]
      %v277 = vld [vmem:[%s234 + $0xd0] sm:$0xff]
      %v278 = vld [vmem:[%s234 + $0xd8] sm:$0xff]
      %v279 = vld [vmem:[%s234 + $0xe0] sm:$0xff]
      %v280 = vld [vmem:[%s234 + $0xe8] sm:$0xff]
      %v281 = vld [vmem:[%s234 + $0xf0] sm:$0xff]
      %v282 = vld [vmem:[%s234 + $0xf8] sm:$0xff]
      %v283 = vld [vmem:[%s240] sm:$0x3]
      %v285 = vperm.slane %v283, 0
      %v286 = vperm.slane %v283, 1
      %289 = vmatpush.msra.mxu0 %v281
      %290 = vmatpush.msra.mxu0 %v279
      %291 = vmatpush.msra.mxu0 %v277
      %292 = vmatpush.msra.mxu0 %v275
      %293 = vmatpush.msra.mxu0 %v273
      %294 = vmatpush.msra.mxu0 %v271
      %295 = vmatpush.msra.mxu0 %v269
      %296 = vmatpush.msra.mxu0 %v267
      %297 = vmatpush.msra.mxu0 %v265
      %298 = vmatpush.msra.mxu0 %v263
      %299 = vmatpush.msra.mxu0 %v261
      %300 = vmatpush.msra.mxu0 %v259
      %301 = vmatpush.msra.mxu0 %v257
      %302 = vmatpush.msra.mxu0 %v255
      %303 = vmatpush.msra.mxu0 %v253
      %304 = vmatpush.msra.mxu0 %v251
      %305 = vmatmul.f32.gmra.mxu0 %v249
      %v306 = vpop.f32.mrf.mxu0
      %v307 = vadd.f32 %v285, %v306
      %308 = vmatmul.f32.gmra.mxu0 %v250
      %v309 = vpop.f32.mrf.mxu0
      %v310 = vadd.f32 %v285, %v309
      %311 = vdwg.mxu0
      %312 = vmatpush.msra.mxu0 %v282
      %313 = vmatpush.msra.mxu0 %v280
      %314 = vmatpush.msra.mxu0 %v278
      %315 = vmatpush.msra.mxu0 %v276
      %316 = vmatpush.msra.mxu0 %v274
      %317 = vmatpush.msra.mxu0 %v272
      %318 = vmatpush.msra.mxu0 %v270
      %319 = vmatpush.msra.mxu0 %v268
      %320 = vmatpush.msra.mxu0 %v266
      %321 = vmatpush.msra.mxu0 %v264
      %322 = vmatpush.msra.mxu0 %v262
      %323 = vmatpush.msra.mxu0 %v260
      %324 = vmatpush.msra.mxu0 %v258
      %325 = vmatpush.msra.mxu0 %v256
      %326 = vmatpush.msra.mxu0 %v254
      %327 = vmatpush.msra.mxu0 %v252
      %328 = vmatmul.f32.gmra.mxu0 %v249
      %v329 = vpop.f32.mrf.mxu0
      %v330 = vadd.f32 %v286, %v329
      %331 = vmatmul.f32.gmra.mxu0 %v250
      %v332 = vpop.f32.mrf.mxu0
      %v333 = vadd.f32 %v286, %v332
      %334 = vdwg.mxu0
      %v335 = vtanh.pop %v307
      %v336 = vtanh.pop %v310
      %v337 = vadd.f32 %v335, %v330
      %v338 = vadd.f32 %v336, %v333
      %v339 = vadd.f32 %v337, %v249
      %v340 = vadd.f32 %v338, %v250
      %341 = vst [vmem:[%s247] sm:$0xff] %v339
      %342 = vst [vmem:[%s247 + $0x8] sm:$0xff] %v340
      %s343 = sld [smem:[#allocation3 + %s29]]
      %p344 = scmp.lt.s32.totalorder %s343, 2
      %s345 = scalar_select %p344, %s343, 2
      %s346 = smul.addr %s345, 2
      %s347 = smul.addr %s346, 8
      %s348 = scalar_lea.vmem %s5, %s347
      // Predicated region
      $region33: #{_forward_impl.1} parent=31 // pred_check
        %p349 = pneg %p133
      $region34: #{_forward_impl.1} parent=31 // pred_check_branch
        %351 = sbr.rel (%p349) target = $region36
      $region35: #{_forward_impl.1} parent=31 // pred_region
        %s352 = sld [smem:[#allocation3 + %s29]]
      $region36: #{_forward_impl.1} parent=31 // pred_fallthru
        _
    $region32: #{_forward_impl.1} parent=5 // pred_fallthru
      _
    %p353 = scmp.le.s32.totalorder 2, %s24
    // Predicated region
    $region37: #{_forward_impl.1} parent=5 // pred_check
      %p354 = pneg %p353
    $region38: #{_forward_impl.1} parent=5 // pred_check_branch
      %356 = sbr.rel (%p354) target = $region40
    $region39: #{_forward_impl.1} parent=5 // pred_region
      %s357 = ssub.s32 %s24, 2
      // Predicated region
      $region41: #{_forward_impl.1} parent=39 // pred_check
        %p358 = pneg %p139
      $region42: #{_forward_impl.1} parent=39 // pred_check_branch
        %360 = sbr.rel (%p358) target = $region44
      $region43: #{_forward_impl.1} parent=39 // pred_region
        %s361 = sld [smem:[#allocation3 + %s30]]
        %p362 = scmp.lt.s32.totalorder %s361, 2
        %s363 = scalar_select %p362, %s361, 2
        %s364 = smul.addr %s363, 2
        %s365 = smul.addr %s364, 8
        %s366 = scalar_lea.vmem %s5, %s365
      $region44: #{_forward_impl.1} parent=39 // pred_fallthru
        _
    $region40: #{_forward_impl.1} parent=5 // pred_fallthru
      _
  $region6: #{_forward_impl.1} parent=0 // loop_footer
    %s28 = sadd.s32 1, %s24
  $region7: #{_forward_impl.1} parent=0 // loop_footer_branch
    %23 = sbr.rel target = $region3
  $region8: #{_forward_impl.1} parent=0 // loop_exit
    _

</llo_original>
